<compile_context>
chip_gen: v7x
topology: tpu7x:2x2x1
jax: 0.10.0
libtpu: 0.0.40
codegen_flags: <defaults>
</compile_context>

<pallas_src>
import jax
import jax.numpy as jnp
from jax.experimental import pallas as pl
from jax.experimental.pallas import tpu as pltpu


def _round_up(x, m):
    return ((x + m - 1) // m) * m


def reward_weight_net_forward(x, w1, b1, w2, b2, *, batch_tile=512):
    """x: (B, input_size) f32. w1: (in, hidden), w2: (hidden, out).
    Returns (B, output_size) f32 = sigmoid(relu(x @ w1 + b1) @ w2 + b2)."""
    f32 = jnp.float32
    B, in_size = x.shape
    hidden = w1.shape[1]
    out_size = w2.shape[1]

    # Lane-dense padded feature sizes (multiples of 128).
    HP = max(128, _round_up(hidden, 128))
    OP = max(128, _round_up(out_size, 128))
    LMAX = max(HP, OP)

    # Zero-pad weights / biases. Exact: padded hidden units get bias 0 and
    # ReLU(0) = 0, and their W2 rows are 0; padded outputs are sliced off.
    w1_p = jnp.zeros((in_size, HP), f32).at[:, :hidden].set(w1.astype(f32))
    w2_p = jnp.zeros((HP, OP), f32).at[:hidden, :out_size].set(w2.astype(f32))
    bias_p = (jnp.zeros((2, LMAX), f32)
              .at[0, :hidden].set(b1.astype(f32))
              .at[1, :out_size].set(b2.astype(f32)))

    # Batch tiling: TB multiple of 8 (f32 sublane), capped for VMEM headroom.
    B8 = max(8, _round_up(B, 8))
    TB = max(8, _round_up(min(batch_tile, B8), 8))
    B_pad = _round_up(B8, TB)
    nb = B_pad // TB

    x_p = jnp.zeros((B_pad, in_size), f32).at[:B, :].set(x.astype(f32))

    def kernel(x_ref, w1_ref, w2_ref, b_ref, o_ref):
        xv = x_ref[...]                                        # (TB, in)
        # fc1 (K = in_size is tiny; MXU is otherwise idle, keep it there).
        h = jnp.dot(xv, w1_ref[...], preferred_element_type=jnp.float32)
        h = h + b_ref[0:1, :HP]                                # sublane bcast
        h = jnp.maximum(h, 0.0)                                # ReLU
        # fc2: (TB, HP) @ (HP, OP) — proper lane-dense MXU matmul.
        z = jnp.dot(h, w2_ref[...], preferred_element_type=jnp.float32)
        z = z + b_ref[1:2, :OP]
        # sigmoid: exp + reciprocal go to the EUP slot.
        o_ref[...] = jax.nn.sigmoid(z).astype(o_ref.dtype)

    flops = int(2 * B_pad * (in_size * HP + HP * OP))
    bytes_accessed = int(4 * (x_p.size + w1_p.size + w2_p.size + bias_p.size
                              + B_pad * OP))
    cost = pl.CostEstimate(flops=flops,
                           transcendentals=int(B_pad * OP),
                           bytes_accessed=bytes_accessed)

    out_pad = pl.pallas_call(
        kernel,
        out_shape=jax.ShapeDtypeStruct((B_pad, OP), f32),
        grid=(nb,),
        in_specs=[
            pl.BlockSpec((TB, in_size), lambda i: (i, 0)),   # x: tiled over batch
            pl.BlockSpec((in_size, HP), lambda i: (0, 0)),   # W1: resident
            pl.BlockSpec((HP, OP), lambda i: (0, 0)),        # W2: resident
            pl.BlockSpec((2, LMAX), lambda i: (0, 0)),       # packed biases
        ],
        out_specs=pl.BlockSpec((TB, OP), lambda i: (i, 0)),  # lane-dense output
        compiler_params=pltpu.CompilerParams(
            dimension_semantics=("parallel",)),
        cost_estimate=cost,
    )(x_p, w1_p, w2_p, bias_p)

    return out_pad[:B, :out_size]


def init_params(key, input_size=4, hidden_size=32, output_size=8):
    """Deterministic init mirroring nn.Linear shapes (stored transposed)."""
    k1, k2, k3, k4 = jax.random.split(key, 4)
    # PyTorch Linear default: U(-1/sqrt(fan_in), 1/sqrt(fan_in))
    lim1 = 1.0 / jnp.sqrt(jnp.float32(input_size))
    lim2 = 1.0 / jnp.sqrt(jnp.float32(hidden_size))
    w1 = jax.random.uniform(k1, (input_size, hidden_size), jnp.float32, -lim1, lim1)
    b1 = jax.random.uniform(k2, (hidden_size,), jnp.float32, -lim1, lim1)
    w2 = jax.random.uniform(k3, (hidden_size, output_size), jnp.float32, -lim2, lim2)
    b2 = jax.random.uniform(k4, (output_size,), jnp.float32, -lim2, lim2)
    return w1, b1, w2, b2


if __name__ == "__main__":
    key = jax.random.PRNGKey(0)
    kx, kp = jax.random.split(key)

    batch, input_size, hidden_size, output_size = 8, 4, 32, 8
    x = jax.random.normal(kx, (batch, input_size), jnp.float32)
    w1, b1, w2, b2 = init_params(kp, input_size, hidden_size, output_size)

    out = reward_weight_net_forward(x, w1, b1, w2, b2)
    out = jax.block_until_ready(out)

    # Reference check in plain JAX (same math) to validate the kernel.
    ref = jax.nn.sigmoid(jnp.maximum(x @ w1 + b1, 0.0) @ w2 + b2)
    assert out.shape == (batch, output_size)
    assert jnp.allclose(out, ref, atol=1e-5, rtol=1e-5)

    print("KERNEL_OK")
</pallas_src>

<mosaic_0001>
module attributes {stable_mosaic.version = 11 : i64} {
  func.func @kernel(%arg0: i32, %arg1: memref<8x4xf32, #tpu.memory_space<vmem>>, %arg2: memref<4x128xf32, #tpu.memory_space<vmem>>, %arg3: memref<128x128xf32, #tpu.memory_space<vmem>>, %arg4: memref<2x128xf32, #tpu.memory_space<vmem>>, %arg5: memref<8x128xf32, #tpu.memory_space<vmem>>) attributes {dimension_semantics = [#tpu.dimension_semantics<parallel>], iteration_bounds = array<i64: 1>, scalar_prefetch = 0 : i64, scratch_operands = 0 : i64, tpu.core_type = #tpu.core_type<tc>, window_params = [{transform_indices = @transform_0, window_bounds = array<i64: 8, 4>}, {pipeline_mode = #tpu.pipeline_mode<synchronous>, transform_indices = @transform_1, window_bounds = array<i64: 4, 128>}, {pipeline_mode = #tpu.pipeline_mode<synchronous>, transform_indices = @transform_2, window_bounds = array<i64: 128, 128>}, {pipeline_mode = #tpu.pipeline_mode<synchronous>, transform_indices = @transform_3, window_bounds = array<i64: 2, 128>}, {transform_indices = @transform_4, window_bounds = array<i64: 8, 128>}]} {
    %c0 = arith.constant 0 : index
    %c0_0 = arith.constant 0 : index
    %0 = vector.load %arg1[%c0, %c0_0] : memref<8x4xf32, #tpu.memory_space<vmem>>, vector<8x4xf32>
    %c0_1 = arith.constant 0 : index
    %c0_2 = arith.constant 0 : index
    %1 = vector.load %arg2[%c0_1, %c0_2] : memref<4x128xf32, #tpu.memory_space<vmem>>, vector<4x128xf32>
    %cst = arith.constant dense<0.000000e+00> : vector<8x128xf32>
    %2 = tpu.matmul %0, %1, %cst {dimension_numbers = #tpu.dot_dimension_numbers<[1], [0], [0], [1], [0, 0, 1, 1], [], []>} : vector<8x4xf32>, vector<4x128xf32>, vector<8x128xf32> -> vector<8x128xf32>
    %c0_3 = arith.constant 0 : index
    %c0_4 = arith.constant 0 : index
    %3 = vector.load %arg4[%c0_3, %c0_4] : memref<2x128xf32, #tpu.memory_space<vmem>>, vector<1x128xf32>
    %4 = vector.broadcast %3 : vector<1x128xf32> to vector<8x128xf32>
    %5 = arith.addf %2, %4 : vector<8x128xf32>
    %cst_5 = arith.constant 0.000000e+00 : f32
    %6 = vector.broadcast %cst_5 : f32 to vector<8x128xf32>
    %7 = arith.maximumf %5, %6 : vector<8x128xf32>
    %c0_6 = arith.constant 0 : index
    %c0_7 = arith.constant 0 : index
    %8 = vector.load %arg3[%c0_6, %c0_7] : memref<128x128xf32, #tpu.memory_space<vmem>>, vector<128x128xf32>
    %cst_8 = arith.constant dense<0.000000e+00> : vector<8x128xf32>
    %9 = tpu.matmul %7, %8, %cst_8 {dimension_numbers = #tpu.dot_dimension_numbers<[1], [0], [0], [1], [0, 0, 1, 1], [], []>} : vector<8x128xf32>, vector<128x128xf32>, vector<8x128xf32> -> vector<8x128xf32>
    %c1 = arith.constant 1 : index
    %c0_9 = arith.constant 0 : index
    %10 = vector.load %arg4[%c1, %c0_9] : memref<2x128xf32, #tpu.memory_space<vmem>>, vector<1x128xf32>
    %11 = vector.broadcast %10 : vector<1x128xf32> to vector<8x128xf32>
    %12 = arith.addf %9, %11 : vector<8x128xf32>
    %13 = arith.negf %12 : vector<8x128xf32>
    %14 = math.exp %13 : vector<8x128xf32>
    %cst_10 = arith.constant 1.000000e+00 : f32
    %15 = vector.broadcast %cst_10 : f32 to vector<8x128xf32>
    %16 = arith.addf %15, %14 : vector<8x128xf32>
    %17 = arith.divf %15, %16 : vector<8x128xf32>
    %c0_11 = arith.constant 0 : index
    %c0_12 = arith.constant 0 : index
    %18 = vector.load %arg5[%c0_11, %c0_12] : memref<8x128xf32, #tpu.memory_space<vmem>>, vector<8x128xf32>
    tpu.vector_store %arg5[%c0_11, %c0_12], %17 {strides = array<i32>} : memref<8x128xf32, #tpu.memory_space<vmem>>, vector<8x128xf32>,
    return
  }
  func.func @transform_0(%arg0: i32) -> (i32, i32) {
    %c0_i32 = arith.constant 0 : i32
    %c0_i32_0 = arith.constant 0 : i32
    return %arg0, %c0_i32 : i32, i32
  }
  func.func @transform_1(%arg0: i32) -> (i32, i32) {
    %c0_i32 = arith.constant 0 : i32
    %c0_i32_0 = arith.constant 0 : i32
    %c0_i32_1 = arith.constant 0 : i32
    return %c0_i32, %c0_i32_0 : i32, i32
  }
  func.func @transform_2(%arg0: i32) -> (i32, i32) {
    %c0_i32 = arith.constant 0 : i32
    %c0_i32_0 = arith.constant 0 : i32
    %c0_i32_1 = arith.constant 0 : i32
    return %c0_i32, %c0_i32_0 : i32, i32
  }
  func.func @transform_3(%arg0: i32) -> (i32, i32) {
    %c0_i32 = arith.constant 0 : i32
    %c0_i32_0 = arith.constant 0 : i32
    %c0_i32_1 = arith.constant 0 : i32
    return %c0_i32, %c0_i32_0 : i32, i32
  }
  func.func @transform_4(%arg0: i32) -> (i32, i32) {
    %c0_i32 = arith.constant 0 : i32
    %c0_i32_0 = arith.constant 0 : i32
    return %arg0, %c0_i32 : i32, i32
  }
}

</mosaic_0001>

<llo_original>
// kernel: tpu_custom_call.1
$region0: #{tpu_custom_call.1}
  #allocation0 [shape = 'u32[]', space=smem, size = 0x4, offset = 0x4, fixed_abs, tag = 'smem constant byte address 0x4 - core index']
  #allocation1 [shape = 'u32[144,128]{1,0:T(1,128)}', space=vmem, size = 0x12000, scoped, tag = 'internal scratch']
  %s0 = inlined_call_operand.vmem [shape: f32[8,4], index: 0, kind: input, shape index: {}]
  %s1 = inlined_call_operand.vmem [shape: f32[4,128], index: 1, kind: input, shape index: {}]
  %s2 = inlined_call_operand.hbm [shape: f32[128,128], index: 2, kind: input, shape index: {}]
  %s3 = inlined_call_operand.vmem [shape: f32[2,128], index: 3, kind: input, shape index: {}]
  %s4 = inlined_call_operand.hbm [shape: f32[8,128], index: 4, kind: output, shape index: {}]
  %s5 = sld [smem:[#allocation0]]
  $region30: #{tpu_custom_call.1} parent=0
    _
  %s7 = ssub.s32 1, %s5
  %s8 = scalar_select 0, %s7, %s5
  $region1: #{tpu_custom_call.1} parent=0
    #allocation2 [shape = 'u8[65536]{0}', space=vmem, size = 0x10000, scoped, tag = 'input window, operand 2, single buffered']
    #allocation3 [shape = 's32[1]{0}', space=sflag, size = 0x4, scoped, tag = 'scoped memory for tpu_custom_call.1']
    #allocation4 [shape = 's32[1]{0}', space=sflag, size = 0x4, scoped, tag = 'scoped memory for tpu_custom_call.1']
    #allocation5 [shape = 'u8[4096]{0}', space=vmem, size = 0x1000, scoped, tag = 'output window, operand 0, single buffered']
    %9 = vsyncpa [#allocation3], 0
    %10 = vsyncpa [#allocation4], 0
    // Predicated region
    $region2: #{tpu_custom_call.1} parent=1 // pred_check
      _
    $region3: #{tpu_custom_call.1} parent=1 // pred_check_branch
      %12 = sbr.rel (0) target = $region5
    $region4: #{tpu_custom_call.1} parent=1 // pred_region
      _
    $region5: #{tpu_custom_call.1} parent=1 // pred_fallthru
      _
    // Predicated region
    $region6: #{tpu_custom_call.1} parent=1 // pred_check
      _
    $region7: #{tpu_custom_call.1} parent=1 // pred_check_branch
      %14 = sbr.rel (0) target = $region9
    $region8: #{tpu_custom_call.1} parent=1 // pred_region
      _
    $region9: #{tpu_custom_call.1} parent=1 // pred_fallthru
      _
    // Predicated region
    $region10: #{tpu_custom_call.1} parent=1 // pred_check
      _
    $region11: #{tpu_custom_call.1} parent=1 // pred_check_branch
      %16 = sbr.rel (0) target = $region13
    $region12: #{tpu_custom_call.1} parent=1 // pred_region
      %s18 = ssub.s32 2048, 2048
      %19 = vsyncadd [#allocation3], %s18
      %s20 = sshll.u32 [#allocation2], 4
      %s21 = int_to_ptr.vmem [resolvable:$true] %s20
      %26 = dma.hbm_to_vmem [thread:$0]  %s2, 2048, %s21, [#allocation3], 128, 128, 8
    $region13: #{tpu_custom_call.1} parent=1 // pred_fallthru
      _
    // Predicated region
    $region14: #{tpu_custom_call.1} parent=1 // pred_check
      _
    $region15: #{tpu_custom_call.1} parent=1 // pred_check_branch
      %28 = sbr.rel (0) target = $region17
    $region16: #{tpu_custom_call.1} parent=1 // pred_region
      _
    $region17: #{tpu_custom_call.1} parent=1 // pred_fallthru
      _
    // Predicated region
    $region18: #{tpu_custom_call.1} parent=1 // pred_check
      _
    $region19: #{tpu_custom_call.1} parent=1 // pred_check_branch
      %30 = sbr.rel (0) target = $region21
    $region20: #{tpu_custom_call.1} parent=1 // pred_region
      %31 = dma.done [#allocation3], 2048
    $region21: #{tpu_custom_call.1} parent=1 // pred_fallthru
      _
    %v32 = vld [vmem:[%s0] sm:$0xff]
    %v33 = vld [vmem:[%s1] sm:$0xf]
    %v34 = vld [vmem:[%s3] sm:$0x1]
    %v35 = vlaneseq
    %v36 = vshrl.u32 %v35, 7
    %v37 = vsub.s32 0, %v36
    %v38 = vrot.slane %v34, %v37
    %vm39 = vcmask 31744
    %v41 = vsel %vm39, %v32, 0
    %vm43 = vcmask 1043456
    %v45 = vsel %vm43, %v33, 0
    %47 = vmatprep.subr.mxu0 0.0
    %48 = vmatpush1.msra.mxu0 %v45
    %49 = vmatprep.subr.mxu0 0.0
    %50 = vmatpush1.msra.mxu0 0.0
    %51 = vmatprep.subr.mxu0 0.0
    %52 = vmatpush1.msra.mxu0 0.0
    %53 = vmatprep.subr.mxu0 0.0
    %54 = vmatpush1.msra.mxu0 0.0
    %55 = vmatprep.subr.mxu0 0.0
    %56 = vmatpush1.msra.mxu0 0.0
    %57 = vmatprep.subr.mxu0 0.0
    %58 = vmatpush1.msra.mxu0 0.0
    %59 = vmatprep.subr.mxu0 0.0
    %60 = vmatpush1.msra.mxu0 0.0
    %61 = vmatprep.subr.mxu0 0.0
    %62 = vmatpush1.msra.mxu0 0.0
    %63 = vmatprep.subr.mxu0 0.0
    %64 = vmatpush1.msra.mxu0 0.0
    %65 = vmatprep.subr.mxu0 0.0
    %66 = vmatpush1.msra.mxu0 0.0
    %67 = vmatprep.subr.mxu0 0.0
    %68 = vmatpush1.msra.mxu0 0.0
    %69 = vmatprep.subr.mxu0 0.0
    %70 = vmatpush1.msra.mxu0 0.0
    %71 = vmatprep.subr.mxu0 0.0
    %72 = vmatpush1.msra.mxu0 0.0
    %73 = vmatprep.subr.mxu0 0.0
    %74 = vmatpush1.msra.mxu0 0.0
    %75 = vmatprep.subr.mxu0 0.0
    %76 = vmatpush1.msra.mxu0 0.0
    %77 = vmatprep.subr.mxu0 0.0
    %78 = vmatpush1.msra.mxu0 0.0
    %79 = vmatprep.subr.mxu0 0.0
    %80 = vmatpush1.msra.mxu0 0.0
    %81 = vmatprep.subr.mxu0 0.0
    %82 = vmatpush1.msra.mxu0 0.0
    %83 = vmatprep.subr.mxu0 0.0
    %84 = vmatpush1.msra.mxu0 0.0
    %85 = vmatprep.subr.mxu0 0.0
    %86 = vmatpush1.msra.mxu0 0.0
    %87 = vmatprep.subr.mxu0 0.0
    %88 = vmatpush1.msra.mxu0 0.0
    %89 = vmatprep.subr.mxu0 0.0
    %90 = vmatpush1.msra.mxu0 0.0
    %91 = vmatprep.subr.mxu0 0.0
    %92 = vmatpush1.msra.mxu0 0.0
    %93 = vmatprep.subr.mxu0 0.0
    %94 = vmatpush1.msra.mxu0 0.0
    %95 = vmatprep.subr.mxu0 0.0
    %96 = vmatpush1.msra.mxu0 0.0
    %97 = vmatprep.subr.mxu0 0.0
    %98 = vmatpush1.msra.mxu0 0.0
    %99 = vmatprep.subr.mxu0 0.0
    %100 = vmatpush1.msra.mxu0 0.0
    %101 = vmatprep.subr.mxu0 0.0
    %102 = vmatpush1.msra.mxu0 0.0
    %103 = vmatprep.subr.mxu0 0.0
    %104 = vmatpush1.msra.mxu0 0.0
    %105 = vmatprep.subr.mxu0 0.0
    %106 = vmatpush1.msra.mxu0 0.0
    %107 = vmatprep.subr.mxu0 0.0
    %108 = vmatpush1.msra.mxu0 0.0
    %109 = vmatprep.subr.mxu0 0.0
    %110 = vmatpush1.msra.mxu0 0.0
    %111 = vmatprep.mubr.f32.mxu0 0.0
    %112 = vmatmul.mubr.f32.gmra.mrb[0].mxu0 %v41
    %v113 = vpop.f32.mrb[0].mxu0
    %v114 = vadd.f32 %v38, %v113
    %v115 = vpop.f32.mrb[0].mxu0
    %116 = vdwg.mxu0
    %v117 = vmax.f32 %v114, 0.0
    %v118 = vld [vmem:[#allocation2] sm:$0xff]
    %v119 = vld [vmem:[#allocation2 + $0x8] sm:$0xff]
    %v120 = vld [vmem:[#allocation2 + $0x10] sm:$0xff]
    %v121 = vld [vmem:[#allocation2 + $0x18] sm:$0xff]
    %v122 = vld [vmem:[#allocation2 + $0x20] sm:$0xff]
    %v123 = vld [vmem:[#allocation2 + $0x28] sm:$0xff]
    %v124 = vld [vmem:[#allocation2 + $0x30] sm:$0xff]
    %v125 = vld [vmem:[#allocation2 + $0x38] sm:$0xff]
    %v126 = vld [vmem:[#allocation2 + $0x40] sm:$0xff]
    %v127 = vld [vmem:[#allocation2 + $0x48] sm:$0xff]
    %v128 = vld [vmem:[#allocation2 + $0x50] sm:$0xff]
    %v129 = vld [vmem:[#allocation2 + $0x58] sm:$0xff]
    %v130 = vld [vmem:[#allocation2 + $0x60] sm:$0xff]
    %v131 = vld [vmem:[#allocation2 + $0x68] sm:$0xff]
    %v132 = vld [vmem:[#allocation2 + $0x70] sm:$0xff]
    %v133 = vld [vmem:[#allocation2 + $0x78] sm:$0xff]
    %v134 = vld [vmem:[%s3 + $0x1] sm:$0x1]
    %v135 = vlaneseq
    %v136 = vshrl.u32 %v135, 7
    %v137 = vsub.s32 0, %v136
    %v138 = vrot.slane %v134, %v137
    %139 = vmatprep.subr.mxu0 0.0
    %140 = vmatpush1.msra.mxu0 %v118
    %141 = vmatprep.subr.mxu0 0.0
    %142 = vmatpush1.msra.mxu0 %v119
    %143 = vmatprep.subr.mxu0 0.0
    %144 = vmatpush1.msra.mxu0 %v120
    %145 = vmatprep.subr.mxu0 0.0
    %146 = vmatpush1.msra.mxu0 %v121
    %147 = vmatprep.subr.mxu0 0.0
    %148 = vmatpush1.msra.mxu0 %v122
    %149 = vmatprep.subr.mxu0 0.0
    %150 = vmatpush1.msra.mxu0 %v123
    %151 = vmatprep.subr.mxu0 0.0
    %152 = vmatpush1.msra.mxu0 %v124
    %153 = vmatprep.subr.mxu0 0.0
    %154 = vmatpush1.msra.mxu0 %v125
    %155 = vmatprep.subr.mxu0 0.0
    %156 = vmatpush1.msra.mxu0 %v126
    %157 = vmatprep.subr.mxu0 0.0
    %158 = vmatpush1.msra.mxu0 %v127
    %159 = vmatprep.subr.mxu0 0.0
    %160 = vmatpush1.msra.mxu0 %v128
    %161 = vmatprep.subr.mxu0 0.0
    %162 = vmatpush1.msra.mxu0 %v129
    %163 = vmatprep.subr.mxu0 0.0
    %164 = vmatpush1.msra.mxu0 %v130
    %165 = vmatprep.subr.mxu0 0.0
    %166 = vmatpush1.msra.mxu0 %v131
    %167 = vmatprep.subr.mxu0 0.0
    %168 = vmatpush1.msra.mxu0 %v132
    %169 = vmatprep.subr.mxu0 0.0
    %170 = vmatpush1.msra.mxu0 %v133
    %171 = vmatprep.subr.mxu0 0.0
    %172 = vmatpush1.msra.mxu0 0.0
    %173 = vmatprep.subr.mxu0 0.0
    %174 = vmatpush1.msra.mxu0 0.0
    %175 = vmatprep.subr.mxu0 0.0
    %176 = vmatpush1.msra.mxu0 0.0
    %177 = vmatprep.subr.mxu0 0.0
    %178 = vmatpush1.msra.mxu0 0.0
    %179 = vmatprep.subr.mxu0 0.0
    %180 = vmatpush1.msra.mxu0 0.0
    %181 = vmatprep.subr.mxu0 0.0
    %182 = vmatpush1.msra.mxu0 0.0
    %183 = vmatprep.subr.mxu0 0.0
    %184 = vmatpush1.msra.mxu0 0.0
    %185 = vmatprep.subr.mxu0 0.0
    %186 = vmatpush1.msra.mxu0 0.0
    %187 = vmatprep.subr.mxu0 0.0
    %188 = vmatpush1.msra.mxu0 0.0
    %189 = vmatprep.subr.mxu0 0.0
    %190 = vmatpush1.msra.mxu0 0.0
    %191 = vmatprep.subr.mxu0 0.0
    %192 = vmatpush1.msra.mxu0 0.0
    %193 = vmatprep.subr.mxu0 0.0
    %194 = vmatpush1.msra.mxu0 0.0
    %195 = vmatprep.subr.mxu0 0.0
    %196 = vmatpush1.msra.mxu0 0.0
    %197 = vmatprep.subr.mxu0 0.0
    %198 = vmatpush1.msra.mxu0 0.0
    %199 = vmatprep.subr.mxu0 0.0
    %200 = vmatpush1.msra.mxu0 0.0
    %201 = vmatprep.subr.mxu0 0.0
    %202 = vmatpush1.msra.mxu0 0.0
    %203 = vmatprep.mubr.f32.mxu0 0.0
    %204 = vmatmul.mubr.f32.gmra.mrb[0].mxu0 %v117
    %v205 = vpop.f32.mrb[0].mxu0
    %v206 = vadd.f32 %v138, %v205
    %v207 = vpop.f32.mrb[0].mxu0
    %208 = vdwg.mxu0
    %v209 = vxor.u32 %v206, 2147483648
    %v210 = vmul.f32 %v209, 1.442695
    %v211 = vpow.pop %v210
    %v212 = vadd.f32 %v211, 1.0
    %v213 = vrcp.pop %v212
    %v214 = vmul.f32 1.0, %v213
    %215 = vst [vmem:[#allocation5] sm:$0xff] %v214
    // Predicated region
    $region22: #{tpu_custom_call.1} parent=1 // pred_check
      _
    $region23: #{tpu_custom_call.1} parent=1 // pred_check_branch
      %217 = sbr.rel (0) target = $region25
    $region24: #{tpu_custom_call.1} parent=1 // pred_region
      %s219 = ssub.s32 128, 128
      %220 = vsyncadd [#allocation4], %s219
      %s222 = sshll.u32 [#allocation5], 4
      %s223 = int_to_ptr.vmem [resolvable:$true] %s222
      %225 = dma.vmem_to_hbm [thread:$0]  %s223, 128, %s4, [#allocation4]
    $region25: #{tpu_custom_call.1} parent=1 // pred_fallthru
      _
    // Predicated region
    $region26: #{tpu_custom_call.1} parent=1 // pred_check
      _
    $region27: #{tpu_custom_call.1} parent=1 // pred_check_branch
      %227 = sbr.rel (0) target = $region29
    $region28: #{tpu_custom_call.1} parent=1 // pred_region
      %228 = dma.done [#allocation4], 128
    $region29: #{tpu_custom_call.1} parent=1 // pred_fallthru
      _
    %229 = vsyncpa [#allocation3], 1
    %230 = vsyncpa [#allocation4], 1

</llo_original>
